<compile_context>
chip_gen: v5e
topology: v5e:2x2
jax: 0.10.0
libtpu: 0.0.40
codegen_flags: <defaults>
</compile_context>

<pallas_src>
import jax
import jax.numpy as jnp
from jax import lax
from jax.experimental import pallas as pl
from jax.experimental.pallas import tpu as pltpu

LN_EPS = 1e-12


def _round_up(x, m):
    return ((x + m - 1) // m) * m


def _vmem_limit_bytes():
    """Half of physical VMEM (leaves headroom for compiler scratch), capped."""
    default = 32 * 1024 * 1024
    try:
        info = pltpu.get_tpu_info()
        cap = getattr(info, "vmem_capacity_bytes", None)
        if cap is None:
            return default
        return int(min(cap // 2, 64 * 1024 * 1024))
    except Exception:
        return default


# --------------------------------------------------------------------------
# Kernels
# --------------------------------------------------------------------------
def transform_kernel(x_ref, w1_ref, b1_ref, g_ref, beta_ref, h_ref):
    """h = LayerNorm(tanh(x @ W1 + b1)) for one token tile (bf16 operands,
    f32 accumulation / LN math, bf16 output)."""
    h = jnp.dot(x_ref[...], w1_ref[...], preferred_element_type=jnp.float32)
    h = h + b1_ref[...]
    h = jnp.tanh(h)
    mu = jnp.mean(h, axis=-1, keepdims=True)
    var = jnp.mean((h - mu) ** 2, axis=-1, keepdims=True)
    h = (h - mu) * lax.rsqrt(var + LN_EPS)
    h_ref[...] = (h * g_ref[...] + beta_ref[...]).astype(h_ref.dtype)


def decoder_kernel(h_ref, w2_ref, bias_ref, out_ref):
    """logits tile = h_tile(bf16) @ W2_tile(bf16) + bias_tile, f32 MXU acc."""
    out_ref[...] = (jnp.dot(h_ref[...], w2_ref[...],
                            preferred_element_type=jnp.float32)
                    + bias_ref[...]).astype(out_ref.dtype)


# --------------------------------------------------------------------------
# One-time parameter preparation (hoisted out of the per-call path)
# --------------------------------------------------------------------------
def prepare_params(params, *, tile_v=1024):
    """Cast / pad / reshape parameters once.  Returns a dict consumed by
    bert_prediction().  tile_v is clamped to the (lane-padded) vocab size."""
    w1, b1, gamma, beta, w2, bias = (
        params["w1"], params["b1"], params["gamma"], params["beta"],
        params["w2"], params["bias"],
    )
    H = w1.shape[0]
    V = w2.shape[1]
    tile_v = min(tile_v, _round_up(V, 128))
    V_pad = _round_up(V, tile_v)

    w2_bf16 = w2.astype(jnp.bfloat16)
    bias_f32 = bias.astype(jnp.float32)
    if V_pad != V:
        w2_bf16 = jnp.pad(w2_bf16, ((0, 0), (0, V_pad - V)))
        bias_f32 = jnp.pad(bias_f32, ((0, V_pad - V),))

    return {
        "w1_bf16": w1.astype(jnp.bfloat16),
        "b1_2d": b1.reshape(1, H).astype(jnp.float32),
        "gamma_2d": gamma.reshape(1, H).astype(jnp.float32),
        "beta_2d": beta.reshape(1, H).astype(jnp.float32),
        "w2_bf16": w2_bf16,
        "bias_2d": bias_f32.reshape(1, V_pad),
        "hidden_size": H,
        "vocab_size": V,
        "tile_v": tile_v,
    }


# --------------------------------------------------------------------------
# Forward pass
# --------------------------------------------------------------------------
def bert_prediction(hidden_states, prep, *, tile_m=512, out_dtype=jnp.bfloat16):
    """hidden_states: (B, S, H).  Returns (B, S, V) logits in out_dtype."""
    B, S, H = hidden_states.shape
    assert H == prep["hidden_size"]
    V = prep["vocab_size"]
    tile_v = prep["tile_v"]
    V_pad = prep["w2_bf16"].shape[1]
    N = B * S

    # Token tiling: multiple of 16 (bf16 packs two rows per sublane).
    tile_m = min(tile_m, _round_up(N, 16))
    N_pad = _round_up(N, tile_m)

    # Stage-1 operands in bf16 (MXU-native); accumulation stays f32 in-kernel.
    x = hidden_states.reshape(N, H).astype(jnp.bfloat16)
    if N_pad != N:
        x = jnp.pad(x, ((0, N_pad - N), (0, 0)))

    vmem_limit = _vmem_limit_bytes()
    n_m_tiles = N_pad // tile_m
    n_v_tiles = V_pad // tile_v

    # ---- Stage 1: transform (dense + tanh + LayerNorm), tiled over tokens ----
    transform_cost = pl.CostEstimate(
        flops=2 * N_pad * H * H,
        transcendentals=N_pad * H,
        bytes_accessed=(N_pad * H * 2) * 2 + H * H * 2 + 3 * H * 4,
    )
    h = pl.pallas_call(
        transform_kernel,
        out_shape=jax.ShapeDtypeStruct((N_pad, H), jnp.bfloat16),
        grid_spec=pltpu.PrefetchScalarGridSpec(
            num_scalar_prefetch=0,
            grid=(n_m_tiles,),
            in_specs=[
                pl.BlockSpec((tile_m, H), lambda i: (i, 0)),   # x token tile (bf16)
                pl.BlockSpec((H, H), lambda i: (0, 0)),        # W1 (in, out) bf16
                pl.BlockSpec((1, H), lambda i: (0, 0)),        # b1 (f32)
                pl.BlockSpec((1, H), lambda i: (0, 0)),        # LN gamma (f32)
                pl.BlockSpec((1, H), lambda i: (0, 0)),        # LN beta (f32)
            ],
            out_specs=pl.BlockSpec((tile_m, H), lambda i: (i, 0)),
        ),
        compiler_params=pltpu.CompilerParams(
            dimension_semantics=("parallel",),
            vmem_limit_bytes=vmem_limit,
        ),
        cost_estimate=transform_cost,
    )(x, prep["w1_bf16"], prep["b1_2d"], prep["gamma_2d"], prep["beta_2d"])

    # ---- Stage 2: decoder GEMM + bias, tiled over (vocab, tokens) ----
    # Vocab axis leads the grid: it always has many tiles, so the leading
    # "parallel" axis load-balances across v7x's two TensorCores even when the
    # token axis has only 1-2 tiles.  With tokens as the fast (inner) axis,
    # each W2 vocab tile is loaded once and reused across all token tiles.
    out_itemsize = jnp.dtype(out_dtype).itemsize
    decoder_cost = pl.CostEstimate(
        flops=2 * N_pad * H * V_pad,
        transcendentals=0,
        bytes_accessed=(N_pad * H * 2) * n_v_tiles      # h re-read per vocab tile
                       + H * V_pad * 2                  # W2 streamed once
                       + N_pad * V_pad * out_itemsize,  # logits writeback
    )
    out = pl.pallas_call(
        decoder_kernel,
        out_shape=jax.ShapeDtypeStruct((N_pad, V_pad), out_dtype),
        grid_spec=pltpu.PrefetchScalarGridSpec(
            num_scalar_prefetch=0,
            grid=(n_v_tiles, n_m_tiles),
            in_specs=[
                pl.BlockSpec((tile_m, H), lambda j, i: (i, 0)),      # h token tile
                pl.BlockSpec((H, tile_v), lambda j, i: (0, j)),      # W2 vocab tile
                pl.BlockSpec((1, tile_v), lambda j, i: (0, j)),      # bias vocab tile
            ],
            out_specs=pl.BlockSpec((tile_m, tile_v), lambda j, i: (i, j)),
        ),
        compiler_params=pltpu.CompilerParams(
            # Every output tile is independent (no reduction grid axis).
            dimension_semantics=("parallel", "parallel"),
            vmem_limit_bytes=vmem_limit,
        ),
        cost_estimate=decoder_cost,
    )(h, prep["w2_bf16"], prep["bias_2d"])

    return out[:N, :V].reshape(B, S, V)


# --------------------------------------------------------------------------
# Parameter init + pure-JAX reference
# --------------------------------------------------------------------------
def init_params(key, hidden_size, vocab_size):
    k1, k2 = jax.random.split(key)
    scale = 0.02
    return {
        # nn.Linear(hidden, hidden): weight stored transposed -> (in, out)
        "w1": scale * jax.random.normal(k1, (hidden_size, hidden_size), jnp.float32),
        "b1": jnp.zeros((hidden_size,), jnp.float32),
        # nn.LayerNorm defaults
        "gamma": jnp.ones((hidden_size,), jnp.float32),
        "beta": jnp.zeros((hidden_size,), jnp.float32),
        # nn.Linear(hidden, vocab, bias=False): weight transposed -> (in, out)
        "w2": scale * jax.random.normal(k2, (hidden_size, vocab_size), jnp.float32),
        # self.bias = nn.Parameter(torch.zeros(vocab_size))
        "bias": jnp.zeros((vocab_size,), jnp.float32),
    }


def reference(hidden_states, p):
    h = hidden_states @ p["w1"] + p["b1"]
    h = jnp.tanh(h)
    mu = jnp.mean(h, axis=-1, keepdims=True)
    var = jnp.mean((h - mu) ** 2, axis=-1, keepdims=True)
    h = (h - mu) / jnp.sqrt(var + LN_EPS)
    h = h * p["gamma"] + p["beta"]
    return h @ p["w2"] + p["bias"]


if __name__ == "__main__":
    # Small, self-consistent "BertConfig".  V is deliberately NOT a multiple of
    # 128 to exercise the vocab-padding path (real BERT vocab 30522 isn't either).
    B, S, H, V = 2, 8, 128, 500
    key = jax.random.PRNGKey(0)
    k_x, k_p = jax.random.split(key)
    x = jax.random.normal(k_x, (B, S, H), jnp.float32)
    params = init_params(k_p, H, V)

    # One-time weight preparation (cast/pad) hoisted out of the forward path.
    prep = prepare_params(params, tile_v=1024)

    out = bert_prediction(x, prep, tile_m=512, out_dtype=jnp.bfloat16)
    out = jax.block_until_ready(out)

    ref = reference(x, params)
    assert out.shape == (B, S, V)
    # bf16 operands + bf16 logits (f32 MXU accumulation), so tolerance is
    # looser than a pure-f32 comparison.
    assert jnp.allclose(out.astype(jnp.float32), ref, atol=3e-2, rtol=3e-2)

    print("KERNEL_OK")
</pallas_src>

<mosaic_0001>
module attributes {stable_mosaic.version = 11 : i64} {
  func.func @transform_kernel(%arg0: i32, %arg1: memref<16x128xbf16, #tpu.memory_space<vmem>>, %arg2: memref<128x128xbf16, #tpu.memory_space<vmem>>, %arg3: memref<1x128xf32, #tpu.memory_space<vmem>>, %arg4: memref<1x128xf32, #tpu.memory_space<vmem>>, %arg5: memref<1x128xf32, #tpu.memory_space<vmem>>, %arg6: memref<16x128xbf16, #tpu.memory_space<vmem>>) attributes {dimension_semantics = [#tpu.dimension_semantics<parallel>], iteration_bounds = array<i64: 1>, scalar_prefetch = 0 : i64, scratch_operands = 0 : i64, tpu.core_type = #tpu.core_type<tc>, window_params = [{transform_indices = @transform_0, window_bounds = array<i64: 16, 128>}, {pipeline_mode = #tpu.pipeline_mode<synchronous>, transform_indices = @transform_1, window_bounds = array<i64: 128, 128>}, {pipeline_mode = #tpu.pipeline_mode<synchronous>, transform_indices = @transform_2, window_bounds = array<i64: 1, 128>}, {pipeline_mode = #tpu.pipeline_mode<synchronous>, transform_indices = @transform_3, window_bounds = array<i64: 1, 128>}, {pipeline_mode = #tpu.pipeline_mode<synchronous>, transform_indices = @transform_4, window_bounds = array<i64: 1, 128>}, {transform_indices = @transform_5, window_bounds = array<i64: 16, 128>}]} {
    %c0 = arith.constant 0 : index
    %c0_0 = arith.constant 0 : index
    %0 = vector.load %arg1[%c0, %c0_0] : memref<16x128xbf16, #tpu.memory_space<vmem>>, vector<16x128xbf16>
    %c0_1 = arith.constant 0 : index
    %c0_2 = arith.constant 0 : index
    %1 = vector.load %arg2[%c0_1, %c0_2] : memref<128x128xbf16, #tpu.memory_space<vmem>>, vector<128x128xbf16>
    %cst = arith.constant dense<0.000000e+00> : vector<16x128xf32>
    %2 = tpu.matmul %0, %1, %cst {dimension_numbers = #tpu.dot_dimension_numbers<[1], [0], [0], [1], [0, 0, 1, 1], [], []>} : vector<16x128xbf16>, vector<128x128xbf16>, vector<16x128xf32> -> vector<16x128xf32>
    %c0_3 = arith.constant 0 : index
    %c0_4 = arith.constant 0 : index
    %3 = vector.load %arg3[%c0_3, %c0_4] : memref<1x128xf32, #tpu.memory_space<vmem>>, vector<1x128xf32>
    %4 = vector.broadcast %3 : vector<1x128xf32> to vector<16x128xf32>
    %5 = arith.addf %2, %4 : vector<16x128xf32>
    %6 = math.tanh %5 : vector<16x128xf32>
    %cst_5 = arith.constant dense<0.000000e+00> : vector<16xf32>
    %7 = vector.multi_reduction <add>, %6, %cst_5 [1] : vector<16x128xf32> to vector<16xf32>
    %8 = vector.shape_cast %7 : vector<16xf32> to vector<16x1xf32>
    %cst_6 = arith.constant 1.280000e+02 : f32
    %9 = vector.broadcast %cst_6 : f32 to vector<16x1xf32>
    %10 = arith.divf %8, %9 : vector<16x1xf32>
    %11 = vector.broadcast %10 : vector<16x1xf32> to vector<16x128xf32>
    %12 = arith.subf %6, %11 : vector<16x128xf32>
    %13 = arith.mulf %12, %12 : vector<16x128xf32>
    %cst_7 = arith.constant dense<0.000000e+00> : vector<16xf32>
    %14 = vector.multi_reduction <add>, %13, %cst_7 [1] : vector<16x128xf32> to vector<16xf32>
    %15 = vector.shape_cast %14 : vector<16xf32> to vector<16x1xf32>
    %cst_8 = arith.constant 1.280000e+02 : f32
    %16 = vector.broadcast %cst_8 : f32 to vector<16x1xf32>
    %17 = arith.divf %15, %16 : vector<16x1xf32>
    %18 = vector.broadcast %10 : vector<16x1xf32> to vector<16x128xf32>
    %19 = arith.subf %6, %18 : vector<16x128xf32>
    %cst_9 = arith.constant 9.99999996E-13 : f32
    %20 = vector.broadcast %cst_9 : f32 to vector<16x1xf32>
    %21 = arith.addf %17, %20 : vector<16x1xf32>
    %22 = math.rsqrt %21 : vector<16x1xf32>
    %23 = vector.broadcast %22 : vector<16x1xf32> to vector<16x128xf32>
    %24 = arith.mulf %19, %23 : vector<16x128xf32>
    %c0_10 = arith.constant 0 : index
    %c0_11 = arith.constant 0 : index
    %25 = vector.load %arg4[%c0_10, %c0_11] : memref<1x128xf32, #tpu.memory_space<vmem>>, vector<1x128xf32>
    %26 = vector.broadcast %25 : vector<1x128xf32> to vector<16x128xf32>
    %27 = arith.mulf %24, %26 : vector<16x128xf32>
    %c0_12 = arith.constant 0 : index
    %c0_13 = arith.constant 0 : index
    %28 = vector.load %arg5[%c0_12, %c0_13] : memref<1x128xf32, #tpu.memory_space<vmem>>, vector<1x128xf32>
    %29 = vector.broadcast %28 : vector<1x128xf32> to vector<16x128xf32>
    %30 = arith.addf %27, %29 : vector<16x128xf32>
    %31 = arith.truncf %30 : vector<16x128xf32> to vector<16x128xbf16>
    %c0_14 = arith.constant 0 : index
    %c0_15 = arith.constant 0 : index
    %32 = vector.load %arg6[%c0_14, %c0_15] : memref<16x128xbf16, #tpu.memory_space<vmem>>, vector<16x128xbf16>
    tpu.vector_store %arg6[%c0_14, %c0_15], %31 {strides = array<i32>} : memref<16x128xbf16, #tpu.memory_space<vmem>>, vector<16x128xbf16>,
    return
  }
  func.func @transform_0(%arg0: i32) -> (i32, i32) {
    %c0_i32 = arith.constant 0 : i32
    %c0_i32_0 = arith.constant 0 : i32
    return %arg0, %c0_i32 : i32, i32
  }
  func.func @transform_1(%arg0: i32) -> (i32, i32) {
    %c0_i32 = arith.constant 0 : i32
    %c0_i32_0 = arith.constant 0 : i32
    %c0_i32_1 = arith.constant 0 : i32
    return %c0_i32, %c0_i32_0 : i32, i32
  }
  func.func @transform_2(%arg0: i32) -> (i32, i32) {
    %c0_i32 = arith.constant 0 : i32
    %c0_i32_0 = arith.constant 0 : i32
    %c0_i32_1 = arith.constant 0 : i32
    return %c0_i32, %c0_i32_0 : i32, i32
  }
  func.func @transform_3(%arg0: i32) -> (i32, i32) {
    %c0_i32 = arith.constant 0 : i32
    %c0_i32_0 = arith.constant 0 : i32
    %c0_i32_1 = arith.constant 0 : i32
    return %c0_i32, %c0_i32_0 : i32, i32
  }
  func.func @transform_4(%arg0: i32) -> (i32, i32) {
    %c0_i32 = arith.constant 0 : i32
    %c0_i32_0 = arith.constant 0 : i32
    %c0_i32_1 = arith.constant 0 : i32
    return %c0_i32, %c0_i32_0 : i32, i32
  }
  func.func @transform_5(%arg0: i32) -> (i32, i32) {
    %c0_i32 = arith.constant 0 : i32
    %c0_i32_0 = arith.constant 0 : i32
    return %arg0, %c0_i32 : i32, i32
  }
}

</mosaic_0001>

<llo_original>
// kernel: tpu_custom_call.1
$region0: #{tpu_custom_call.1}
  #allocation0 [shape = 'u32[]', space=smem, size = 0x4, offset = 0x4, fixed_abs, tag = 'smem constant byte address 0x4 - core index']
  #allocation1 [shape = 'u32[72,128]{1,0:T(1,128)}', space=vmem, size = 0x9000, scoped, tag = 'internal scratch']
  %s0 = inlined_call_operand.hbm [shape: bf16[16,128], index: 0, kind: input, shape index: {}]
  %s1 = inlined_call_operand.hbm [shape: bf16[128,128], index: 1, kind: input, shape index: {}]
  %s2 = inlined_call_operand.vmem [shape: f32[1,128], index: 2, kind: input, shape index: {}]
  %s3 = inlined_call_operand.vmem [shape: f32[1,128], index: 3, kind: input, shape index: {}]
  %s4 = inlined_call_operand.vmem [shape: f32[1,128], index: 4, kind: input, shape index: {}]
  %s5 = inlined_call_operand.hbm [shape: bf16[16,128], index: 5, kind: output, shape index: {}]
  %s6 = sld [smem:[#allocation0]]
  $region38: #{tpu_custom_call.1} parent=0
    _
  %s8 = ssub.s32 1, %s6
  %s9 = scalar_select 0, %s8, %s6
  $region1: #{tpu_custom_call.1} parent=0
    #allocation2 [shape = 'u8[4096]{0}', space=vmem, size = 0x1000, scoped, tag = 'input window, operand 0, single buffered']
    #allocation3 [shape = 's32[1]{0}', space=sflag, size = 0x4, scoped, tag = 'scoped memory for tpu_custom_call.1']
    #allocation4 [shape = 's32[1]{0}', space=sflag, size = 0x4, scoped, tag = 'scoped memory for tpu_custom_call.1']
    #allocation5 [shape = 'u8[32768]{0}', space=vmem, size = 0x8000, scoped, tag = 'input window, operand 1, single buffered']
    #allocation6 [shape = 's32[1]{0}', space=sflag, size = 0x4, scoped, tag = 'scoped memory for tpu_custom_call.1']
    #allocation7 [shape = 'u8[4096]{0}', space=vmem, size = 0x1000, scoped, tag = 'output window, operand 0, single buffered']
    %10 = vsyncpa [#allocation3], 0
    %11 = vsyncpa [#allocation6], 0
    %12 = vsyncpa [#allocation4], 0
    // Predicated region
    $region2: #{tpu_custom_call.1} parent=1 // pred_check
      _
    $region3: #{tpu_custom_call.1} parent=1 // pred_check_branch
      %14 = sbr.rel (0) target = $region5
    $region4: #{tpu_custom_call.1} parent=1 // pred_region
      %16 = vsyncadd [#allocation3], 0
      %s17 = sshll.u32 %s0, 4
      %s18 = int_to_ptr.hbm [resolvable:$true] %s17
      %s19 = sshll.u32 [#allocation2], 4
      %s20 = int_to_ptr.vmem [resolvable:$true] %s19
      %25 = dma.hbm_to_vmem [thread:$0]  %s18, 128, %s20, [#allocation3], 64, 64, 4
    $region5: #{tpu_custom_call.1} parent=1 // pred_fallthru
      _
    // Predicated region
    $region6: #{tpu_custom_call.1} parent=1 // pred_check
      _
    $region7: #{tpu_custom_call.1} parent=1 // pred_check_branch
      %27 = sbr.rel (0) target = $region9
    $region8: #{tpu_custom_call.1} parent=1 // pred_region
      %29 = vsyncadd [#allocation6], 0
      %s30 = sshll.u32 %s1, 4
      %s31 = int_to_ptr.hbm [resolvable:$true] %s30
      %s32 = sshll.u32 [#allocation5], 4
      %s33 = int_to_ptr.vmem [resolvable:$true] %s32
      %38 = dma.hbm_to_vmem [thread:$0]  %s31, 1024, %s33, [#allocation6], 64, 64, 4
    $region9: #{tpu_custom_call.1} parent=1 // pred_fallthru
      _
    // Predicated region
    $region10: #{tpu_custom_call.1} parent=1 // pred_check
      _
    $region11: #{tpu_custom_call.1} parent=1 // pred_check_branch
      %40 = sbr.rel (0) target = $region13
    $region12: #{tpu_custom_call.1} parent=1 // pred_region
      _
    $region13: #{tpu_custom_call.1} parent=1 // pred_fallthru
      _
    // Predicated region
    $region14: #{tpu_custom_call.1} parent=1 // pred_check
      _
    $region15: #{tpu_custom_call.1} parent=1 // pred_check_branch
      %42 = sbr.rel (0) target = $region17
    $region16: #{tpu_custom_call.1} parent=1 // pred_region
      _
    $region17: #{tpu_custom_call.1} parent=1 // pred_fallthru
      _
    // Predicated region
    $region18: #{tpu_custom_call.1} parent=1 // pred_check
      _
    $region19: #{tpu_custom_call.1} parent=1 // pred_check_branch
      %44 = sbr.rel (0) target = $region21
    $region20: #{tpu_custom_call.1} parent=1 // pred_region
      _
    $region21: #{tpu_custom_call.1} parent=1 // pred_fallthru
      _
    // Predicated region
    $region22: #{tpu_custom_call.1} parent=1 // pred_check
      _
    $region23: #{tpu_custom_call.1} parent=1 // pred_check_branch
      %46 = sbr.rel (0) target = $region25
    $region24: #{tpu_custom_call.1} parent=1 // pred_region
      %48 = dma.done [#allocation3], 128
    $region25: #{tpu_custom_call.1} parent=1 // pred_fallthru
      _
    // Predicated region
    $region26: #{tpu_custom_call.1} parent=1 // pred_check
      _
    $region27: #{tpu_custom_call.1} parent=1 // pred_check_branch
      %50 = sbr.rel (0) target = $region29
    $region28: #{tpu_custom_call.1} parent=1 // pred_region
      %52 = dma.done [#allocation6], 1024
    $region29: #{tpu_custom_call.1} parent=1 // pred_fallthru
      _
    %v53 = vld [vmem:[#allocation2] sm:$0xf]
    %v54 = vld [vmem:[#allocation2 + $0x4] sm:$0xf]
    %v55 = vld [vmem:[#allocation5] sm:$0xf]
    %v56 = vld [vmem:[#allocation5 + $0x4] sm:$0xf]
    %v57 = vld [vmem:[#allocation5 + $0x8] sm:$0xf]
    %v58 = vld [vmem:[#allocation5 + $0xc] sm:$0xf]
    %v59 = vld [vmem:[#allocation5 + $0x10] sm:$0xf]
    %v60 = vld [vmem:[#allocation5 + $0x14] sm:$0xf]
    %v61 = vld [vmem:[#allocation5 + $0x18] sm:$0xf]
    %v62 = vld [vmem:[#allocation5 + $0x1c] sm:$0xf]
    %v63 = vld [vmem:[#allocation5 + $0x20] sm:$0xf]
    %v64 = vld [vmem:[#allocation5 + $0x24] sm:$0xf]
    %v65 = vld [vmem:[#allocation5 + $0x28] sm:$0xf]
    %v66 = vld [vmem:[#allocation5 + $0x2c] sm:$0xf]
    %v67 = vld [vmem:[#allocation5 + $0x30] sm:$0xf]
    %v68 = vld [vmem:[#allocation5 + $0x34] sm:$0xf]
    %v69 = vld [vmem:[#allocation5 + $0x38] sm:$0xf]
    %v70 = vld [vmem:[#allocation5 + $0x3c] sm:$0xf]
    %v71 = vld [vmem:[%s2] sm:$0x1]
    %v73 = vperm.slane %v71, 0
    %v77 = vunpack.c.l.b16 %v53
    %v78 = vunpack.c.l.b16 %v54
    %v79 = vpack.c.b16 %v78, %v77
    %v97 = vunpack.c.l.b16 %v55
    %v98 = vunpack.c.l.b16 %v56
    %v99 = vunpack.c.l.b16 %v57
    %v100 = vunpack.c.l.b16 %v58
    %v101 = vunpack.c.l.b16 %v59
    %v102 = vunpack.c.l.b16 %v60
    %v103 = vunpack.c.l.b16 %v61
    %v104 = vunpack.c.l.b16 %v62
    %v105 = vunpack.c.l.b16 %v63
    %v106 = vunpack.c.l.b16 %v64
    %v107 = vunpack.c.l.b16 %v65
    %v108 = vunpack.c.l.b16 %v66
    %v109 = vunpack.c.l.b16 %v67
    %v110 = vunpack.c.l.b16 %v68
    %v111 = vunpack.c.l.b16 %v69
    %v112 = vunpack.c.l.b16 %v70
    %v113 = vpack.c.b16 %v98, %v97
    %v114 = vpack.c.b16 %v100, %v99
    %v115 = vpack.c.b16 %v102, %v101
    %v116 = vpack.c.b16 %v104, %v103
    %v117 = vpack.c.b16 %v106, %v105
    %v118 = vpack.c.b16 %v108, %v107
    %v119 = vpack.c.b16 %v110, %v109
    %v120 = vpack.c.b16 %v112, %v111
    %129 = vmatpush.bf16.msra.mxu0 %v120
    %130 = vmatpush.bf16.msra.mxu0 %v119
    %131 = vmatpush.bf16.msra.mxu0 %v118
    %132 = vmatpush.bf16.msra.mxu0 %v117
    %133 = vmatpush.bf16.msra.mxu0 %v116
    %134 = vmatpush.bf16.msra.mxu0 %v115
    %135 = vmatpush.bf16.msra.mxu0 %v114
    %136 = vmatpush.bf16.msra.mxu0 %v113
    %137 = vmatmul.bf16.gmra.mxu0 %v79
    %v138 = vpop.f32.mrf.mxu0
    %v139 = vadd.f32 %v73, %v138
    %v140 = vpop.f32.mrf.mxu0
    %v141 = vadd.f32 %v73, %v140
    %142 = vdwg.mxu0
    %v143 = vtanh.pop %v139
    %v144 = vtanh.pop %v141
    %145 = vadd.xlane.f32.xlu0 %v143
    %v146 = vpop.xlane.xlu0 %145
    %147 = vadd.xlane.f32.xlu0 %v144
    %v148 = vpop.xlane.xlu0 %147
    %v149 = vrcp.pop 128.0
    %v150 = vmul.f32 128.0, %v149
    %v151 = vsub.f32 1.0, %v150
    %v152 = vmul.f32 %v149, %v151
    %v153 = vadd.f32 %v149, %v152
    %vm154 = vweird.f32 %v149
    %v155 = vsel %vm154, %v149, %v153
    %v156 = vmul.f32 %v146, %v155
    %v157 = vmul.f32 %v148, %v155
    %v158 = vsub.f32 %v143, %v156
    %v159 = vsub.f32 %v144, %v157
    %v160 = vmul.f32 %v158, %v158
    %v161 = vmul.f32 %v159, %v159
    %162 = vadd.xlane.f32.xlu0 %v160
    %v163 = vpop.xlane.xlu0 %162
    %164 = vadd.xlane.f32.xlu0 %v161
    %v165 = vpop.xlane.xlu0 %164
    %v166 = vmul.f32 %v163, %v155
    %v167 = vmul.f32 %v165, %v155
    %v168 = vadd.f32 %v166, 1e-12
    %v169 = vadd.f32 %v167, 1e-12
    %v170 = vrsqrt.pop %v168
    %v171 = vmul.f32 %v170, %v168
    %v172 = vmul.f32 %v171, %v170
    %v173 = vmul.f32 0.5, %v172
    %v174 = vsub.f32 1.5, %v173
    %v175 = vmul.f32 %v170, %v174
    %vm176 = vweird.f32 %v168
    %vm177 = vweird.f32 %v170
    %vm178 = vmor %vm176, %vm177
    %v179 = vsel %vm178, %v170, %v175
    %v180 = vrsqrt.pop %v169
    %v181 = vmul.f32 %v180, %v169
    %v182 = vmul.f32 %v181, %v180
    %v183 = vmul.f32 0.5, %v182
    %v184 = vsub.f32 1.5, %v183
    %v185 = vmul.f32 %v180, %v184
    %vm186 = vweird.f32 %v169
    %vm187 = vweird.f32 %v180
    %vm188 = vmor %vm186, %vm187
    %v189 = vsel %vm188, %v180, %v185
    %v190 = vmul.f32 %v158, %v179
    %v191 = vmul.f32 %v159, %v189
    %v192 = vld [vmem:[%s3] sm:$0x1]
    %v194 = vperm.slane %v192, 0
    %v196 = vmul.f32 %v190, %v194
    %v197 = vmul.f32 %v191, %v194
    %v198 = vld [vmem:[%s4] sm:$0x1]
    %v200 = vperm.slane %v198, 0
    %v202 = vadd.f32 %v196, %v200
    %v203 = vadd.f32 %v197, %v200
    %v204 = vpack.c.bf16 %v202, %v202
    %v205 = vpack.c.bf16 %v203, %v203
    %206 = vst [vmem:[#allocation7] sm:$0xf] %v204
    %207 = vst [vmem:[#allocation7 + $0x4] sm:$0xf] %v205
    // Predicated region
    $region30: #{tpu_custom_call.1} parent=1 // pred_check
      _
    $region31: #{tpu_custom_call.1} parent=1 // pred_check_branch
      %209 = sbr.rel (0) target = $region33
    $region32: #{tpu_custom_call.1} parent=1 // pred_region
      %211 = vsyncadd [#allocation4], 0
      %s212 = sshll.u32 [#allocation7], 4
      %s213 = int_to_ptr.vmem [resolvable:$true] %s212
      %s214 = sshll.u32 %s5, 4
      %s215 = int_to_ptr.hbm [resolvable:$true] %s214
      %220 = dma.vmem_to_hbm [thread:$0]  %s213, 128, %s215, [#allocation4], 64, 64, 4
    $region33: #{tpu_custom_call.1} parent=1 // pred_fallthru
      _
    // Predicated region
    $region34: #{tpu_custom_call.1} parent=1 // pred_check
      _
    $region35: #{tpu_custom_call.1} parent=1 // pred_check_branch
      %222 = sbr.rel (0) target = $region37
    $region36: #{tpu_custom_call.1} parent=1 // pred_region
      %224 = dma.done [#allocation4], 128
    $region37: #{tpu_custom_call.1} parent=1 // pred_fallthru
      _
    %225 = vsyncpa [#allocation3], 1
    %226 = vsyncpa [#allocation6], 1
    %227 = vsyncpa [#allocation4], 1

</llo_original>
